<compile_context>
chip_gen: v7x
topology: tpu7x:2x2x1
jax: 0.10.0
libtpu: 0.0.40
codegen_flags: <defaults>
</compile_context>

<pallas_src>
import jax
import jax.numpy as jnp
from jax.experimental import pallas as pl
from jax.experimental.pallas import tpu as pltpu

_SCALE_HEADS = 2
_SCALE_OUT = 64
_SCALE_COLS = _SCALE_HEADS * _SCALE_OUT   # 128 : sigmoid region = lane group 0
_SHIFT_COLS = 2                           # tanh(reg(h)) output width
_TANH_OFF = _SCALE_COLS                   # 128 : tanh region = lane group 1
_PACKED_COLS = 256                        # lane-dense packed output width


# --------------------------------------------------------------------------
# Fused kernel: both branches share the encoder matmul; two lane-group-aligned
# slab writes (no iota/select, each transcendental evaluated once).
# --------------------------------------------------------------------------
def _fused_kernel(x_ref, we_ref, be_ref, w2_ref, b2_ref, o_ref):
    # x:  (R, D)   f32   stacked [shift rows ; scale row ; zero pad rows]
    # we: (D, H)   bf16  encoder weight, pre-transposed
    # be: (1, H)   f32   encoder bias
    # w2: (H, 256) bf16  packed [W0^T | W1^T | Wr^T | 0]
    # b2: (1, 256) f32   packed [0 (128) | b_reg (2) | 0]
    # o:  (R, 256) f32   cols 0:128 -> sigmoid (scale heads), 128:130 -> tanh (shift)
    x = x_ref[...].astype(jnp.bfloat16)
    h = jnp.dot(x, we_ref[...], preferred_element_type=jnp.float32) + be_ref[...]
    h = jnp.maximum(h, 0.0)                                            # ReLU
    y = jnp.dot(h.astype(jnp.bfloat16), w2_ref[...],
                preferred_element_type=jnp.float32) + b2_ref[...]
    # Each activation covers exactly one 128-lane group -> unmasked stores.
    o_ref[:, :_TANH_OFF] = jax.nn.sigmoid(y[:, :_TANH_OFF])
    o_ref[:, _TANH_OFF:] = jnp.tanh(y[:, _TANH_OFF:])


def _vmem():
    return pl.BlockSpec(memory_space=pltpu.MemorySpace.VMEM)


# --------------------------------------------------------------------------
# One-time parameter packing (hoisted out of the per-call hot path).
# --------------------------------------------------------------------------
def prepare_rsc_params(w_enc, b_enc, w_reg, b_reg, w0, w1):
    """Pack PyTorch-layout parameters into the kernel's lane-dense layout."""
    hidden = w_enc.shape[0]
    we_t = jnp.asarray(w_enc, jnp.float32).T.astype(jnp.bfloat16)     # (D, H) bf16
    be = jnp.asarray(b_enc, jnp.float32).reshape(1, -1)               # (1, H) f32

    w2 = jnp.zeros((hidden, _PACKED_COLS), jnp.float32)
    w2 = w2.at[:, 0:_SCALE_OUT].set(jnp.asarray(w0, jnp.float32).T)
    w2 = w2.at[:, _SCALE_OUT:_SCALE_COLS].set(jnp.asarray(w1, jnp.float32).T)
    w2 = w2.at[:, _TANH_OFF:_TANH_OFF + _SHIFT_COLS].set(jnp.asarray(w_reg, jnp.float32).T)
    w2 = w2.astype(jnp.bfloat16)                                      # (H, 256) bf16

    b2 = jnp.zeros((1, _PACKED_COLS), jnp.float32)
    b2 = b2.at[0, _TANH_OFF:_TANH_OFF + _SHIFT_COLS].set(jnp.asarray(b_reg, jnp.float32))

    return {"we_t": we_t, "be": be, "w2": w2, "b2": b2}


def _round_up(n, m):
    return ((n + m - 1) // m) * m


# --------------------------------------------------------------------------
# Fused forward: one pallas_call emits both branch outputs.
# --------------------------------------------------------------------------
@jax.jit
def rsc_nn_forward(params, x_shift, x_scale):
    """Returns (shift_out (N,2), scale_out (2,64)) from one fused kernel."""
    # Trace-time check only (PyTorch scale path only broadcasts for batch 1).
    assert x_scale.shape[0] == 1, "scale path requires batch size 1 (PyTorch semantics)"
    n_shift, d = x_shift.shape

    # Bucket rows to a sublane multiple: avoids per-batch-size recompiles and
    # keeps loads/stores on full (8, .) tiles.  Replaces the old concatenate:
    # two static dynamic_update_slice ops fuse into a single XLA fusion.
    rows = max(8, _round_up(n_shift + 1, 8))
    x_all = jnp.zeros((rows, d), jnp.float32)
    x_all = jax.lax.dynamic_update_slice(x_all, x_shift.astype(jnp.float32), (0, 0))
    x_all = jax.lax.dynamic_update_slice(x_all, x_scale.astype(jnp.float32), (n_shift, 0))

    packed = pl.pallas_call(
        _fused_kernel,
        out_shape=jax.ShapeDtypeStruct((rows, _PACKED_COLS), jnp.float32),
        in_specs=[_vmem()] * 5,
        out_specs=_vmem(),
    )(x_all, params["we_t"], params["be"], params["w2"], params["b2"])

    out_shift = packed[:n_shift, _TANH_OFF:_TANH_OFF + _SHIFT_COLS]              # (N, 2)
    out_scale = packed[n_shift, :_SCALE_COLS].reshape(_SCALE_HEADS, _SCALE_OUT)  # (2, 64)
    return out_shift, out_scale


# Convenience dispatcher mirroring the PyTorch forward(inputs, shift_or_scale).
# TODO(synk): if production usage is branch-specific or N grows large, add
# specialized shift-only (128-wide slab) / scale-only pallas_calls instead of
# routing a dummy row through the fused everything-kernel.
def rsc_nn_apply(params, inputs, shift_or_scale):
    d = inputs.shape[1]
    dummy = jnp.zeros((1, d), jnp.float32)
    if shift_or_scale == "shift":
        out_shift, _ = rsc_nn_forward(params, inputs, dummy)
        return out_shift
    elif shift_or_scale == "scale":
        _, out_scale = rsc_nn_forward(params, dummy, inputs)
        return out_scale
    raise ValueError(shift_or_scale)


# --------------------------------------------------------------------------
# Main
# --------------------------------------------------------------------------
if __name__ == "__main__":
    erm_input_dim = 16
    hidden_dim = 32
    batch = 2

    key = jax.random.PRNGKey(0)
    k = jax.random.split(key, 8)

    # Deterministic synthetic parameters (shapes from Rsc_NN.__init__)
    lim_enc = 1.0 / (erm_input_dim ** 0.5)
    lim_reg = 1.0 / (hidden_dim ** 0.5)
    w_enc = jax.random.uniform(k[0], (hidden_dim, erm_input_dim),
                               minval=-lim_enc, maxval=lim_enc, dtype=jnp.float32)
    b_enc = jax.random.uniform(k[1], (hidden_dim,),
                               minval=-lim_enc, maxval=lim_enc, dtype=jnp.float32)
    w_reg = jax.random.uniform(k[2], (2, hidden_dim),
                               minval=-lim_reg, maxval=lim_reg, dtype=jnp.float32)
    b_reg = jax.random.uniform(k[3], (2,),
                               minval=-lim_reg, maxval=lim_reg, dtype=jnp.float32)
    w0 = jax.random.normal(k[4], (64, hidden_dim), dtype=jnp.float32)
    w1 = jax.random.normal(k[5], (64, hidden_dim), dtype=jnp.float32)

    # One-time weight packing (outside the hot path).
    params = prepare_rsc_params(w_enc, b_enc, w_reg, b_reg, w0, w1)
    params = jax.tree_util.tree_map(jax.block_until_ready, params)

    # Inputs
    x_shift = jax.random.normal(k[6], (batch, erm_input_dim), dtype=jnp.float32)
    x_scale = jax.random.normal(k[7], (1, erm_input_dim), dtype=jnp.float32)

    # Single fused kernel launch computes both branch outputs.
    out_shift, out_scale = rsc_nn_forward(params, x_shift, x_scale)
    jax.block_until_ready(out_shift)
    jax.block_until_ready(out_scale)
    assert out_shift.shape == (batch, 2)
    assert out_scale.shape == (2, 64)

    # ---- Correctness checks --------------------------------------------
    def _bf(v):  # round through bf16 (the kernel's deliberate weight storage)
        return jnp.asarray(v, jnp.float32).astype(jnp.bfloat16).astype(jnp.float32)

    # (a) Strict plumbing check vs. a reference using the same bf16-rounded
    #     operands (isolates packing/activation-region correctness).
    xq, weq, wrq, w0q, w1q = _bf(x_shift), _bf(w_enc), _bf(w_reg), _bf(w0), _bf(w1)
    h1 = _bf(jnp.maximum(xq @ weq.T + b_enc, 0.0))
    ref_shift_q = jnp.tanh(h1 @ wrq.T + b_reg)
    xsq = _bf(x_scale)
    h2 = _bf(jnp.maximum(xsq @ weq.T + b_enc, 0.0))
    ref_scale_q = jax.nn.sigmoid(jnp.stack([(h2 @ w0q.T)[0], (h2 @ w1q.T)[0]], axis=0))
    assert jnp.allclose(out_shift, ref_shift_q, atol=1e-4)
    assert jnp.allclose(out_scale, ref_scale_q, atol=1e-4)

    # (b) Loose semantic check vs. the full-f32 PyTorch-equivalent reference
    #     (difference only from the deliberate bf16 weight storage / MXU path).
    h_ref = jnp.maximum(x_shift @ w_enc.T + b_enc, 0.0)
    ref_shift = jnp.tanh(h_ref @ w_reg.T + b_reg)
    h2_ref = jnp.maximum(x_scale @ w_enc.T + b_enc, 0.0)
    ref_scale = jax.nn.sigmoid(
        jnp.stack([(h2_ref @ w0.T)[0], (h2_ref @ w1.T)[0]], axis=0))
    assert jnp.allclose(out_shift, ref_shift, atol=5e-2)
    assert jnp.allclose(out_scale, ref_scale, atol=5e-2)

    print("KERNEL_OK")
</pallas_src>

<mosaic_0001>
module attributes {stable_mosaic.version = 11 : i64} {
  func.func @_fused_kernel(%arg0: memref<8x16xf32, #tpu.memory_space<vmem>>, %arg1: memref<16x32xbf16, #tpu.memory_space<vmem>>, %arg2: memref<1x32xf32, #tpu.memory_space<vmem>>, %arg3: memref<32x256xbf16, #tpu.memory_space<vmem>>, %arg4: memref<1x256xf32, #tpu.memory_space<vmem>>, %arg5: memref<8x256xf32, #tpu.memory_space<vmem>>) attributes {dimension_semantics = [], scalar_prefetch = 0 : i64, scratch_operands = 0 : i64, tpu.core_type = #tpu.core_type<tc>} {
    %c0 = arith.constant 0 : index
    %c0_0 = arith.constant 0 : index
    %0 = vector.load %arg0[%c0, %c0_0] : memref<8x16xf32, #tpu.memory_space<vmem>>, vector<8x16xf32>
    %1 = arith.truncf %0 : vector<8x16xf32> to vector<8x16xbf16>
    %c0_1 = arith.constant 0 : index
    %c0_2 = arith.constant 0 : index
    %2 = vector.load %arg1[%c0_1, %c0_2] : memref<16x32xbf16, #tpu.memory_space<vmem>>, vector<16x32xbf16>
    %cst = arith.constant dense<0.000000e+00> : vector<8x32xf32>
    %3 = tpu.matmul %1, %2, %cst {dimension_numbers = #tpu.dot_dimension_numbers<[1], [0], [0], [1], [0, 0, 1, 1], [], []>} : vector<8x16xbf16>, vector<16x32xbf16>, vector<8x32xf32> -> vector<8x32xf32>
    %c0_3 = arith.constant 0 : index
    %c0_4 = arith.constant 0 : index
    %4 = vector.load %arg2[%c0_3, %c0_4] : memref<1x32xf32, #tpu.memory_space<vmem>>, vector<1x32xf32>
    %5 = vector.broadcast %4 : vector<1x32xf32> to vector<8x32xf32>
    %6 = arith.addf %3, %5 : vector<8x32xf32>
    %cst_5 = arith.constant 0.000000e+00 : f32
    %7 = vector.broadcast %cst_5 : f32 to vector<8x32xf32>
    %8 = arith.maximumf %6, %7 : vector<8x32xf32>
    %9 = arith.truncf %8 : vector<8x32xf32> to vector<8x32xbf16>
    %c0_6 = arith.constant 0 : index
    %c0_7 = arith.constant 0 : index
    %10 = vector.load %arg3[%c0_6, %c0_7] : memref<32x256xbf16, #tpu.memory_space<vmem>>, vector<32x256xbf16>
    %cst_8 = arith.constant dense<0.000000e+00> : vector<8x256xf32>
    %11 = tpu.matmul %9, %10, %cst_8 {dimension_numbers = #tpu.dot_dimension_numbers<[1], [0], [0], [1], [0, 0, 1, 1], [], []>} : vector<8x32xbf16>, vector<32x256xbf16>, vector<8x256xf32> -> vector<8x256xf32>
    %c0_9 = arith.constant 0 : index
    %c0_10 = arith.constant 0 : index
    %12 = vector.load %arg4[%c0_9, %c0_10] : memref<1x256xf32, #tpu.memory_space<vmem>>, vector<1x256xf32>
    %13 = vector.broadcast %12 : vector<1x256xf32> to vector<8x256xf32>
    %14 = arith.addf %11, %13 : vector<8x256xf32>
    %15 = vector.extract_strided_slice %14 {offsets = [0, 0], sizes = [8, 128], strides = [1, 1]} : vector<8x256xf32> to vector<8x128xf32>
    %16 = arith.negf %15 : vector<8x128xf32>
    %17 = math.exp %16 : vector<8x128xf32>
    %cst_11 = arith.constant 1.000000e+00 : f32
    %18 = vector.broadcast %cst_11 : f32 to vector<8x128xf32>
    %19 = arith.addf %18, %17 : vector<8x128xf32>
    %20 = arith.divf %18, %19 : vector<8x128xf32>
    %c0_12 = arith.constant 0 : index
    %c0_13 = arith.constant 0 : index
    %21 = vector.load %arg5[%c0_12, %c0_13] : memref<8x256xf32, #tpu.memory_space<vmem>>, vector<8x128xf32>
    tpu.vector_store %arg5[%c0_12, %c0_13], %20 {strides = array<i32>} : memref<8x256xf32, #tpu.memory_space<vmem>>, vector<8x128xf32>,
    %22 = vector.extract_strided_slice %14 {offsets = [0, 128], sizes = [8, 128], strides = [1, 1]} : vector<8x256xf32> to vector<8x128xf32>
    %23 = math.tanh %22 : vector<8x128xf32>
    %c0_14 = arith.constant 0 : index
    %c128 = arith.constant 128 : index
    %24 = vector.load %arg5[%c0_14, %c128] : memref<8x256xf32, #tpu.memory_space<vmem>>, vector<8x128xf32>
    tpu.vector_store %arg5[%c0_14, %c128], %23 {strides = array<i32>} : memref<8x256xf32, #tpu.memory_space<vmem>>, vector<8x128xf32>,
    return
  }
}

</mosaic_0001>

<llo_original>
// kernel: squeeze.1
$region0: #{squeeze.1}
  %s0 = inlined_call_operand.vmem [shape: f32[128], index: 0, kind: input, shape index: {}]
  %s1 = inlined_call_operand.hbm [shape: f32[2,64], index: 1, kind: output, shape index: {}]
  $region1: #{squeeze.1} parent=0
    #allocation0 [shape = 'u8[1024]{0}', space=vmem, size = 0x400, scoped, tag = 'operand span for operand 1']
    #allocation1 [shape = 's32[1]{0}', space=sflag, size = 0x4, scoped, tag = 'scoped memory for squeeze.1']
    #allocation2 [shape = 'u8[4096]{0}', space=vmem, size = 0x1000, scoped, tag = 'scoped mem for output reshape']
    #allocation3 [shape = 'u8[4096]{0}', space=vmem, size = 0x1000, scoped, tag = 'scoped mem for input reshape']
    %2 = vsyncpa [#allocation1], 0
    %s4 = sshllo.u32 0, 1
    %v5 = vld [vmem:[%s0] sm:%s4]
    %6 = vst [vmem:[#allocation3] sm:%s4] %v5
    %v7 = vld [vmem:[#allocation3] sm:$0x1]
    %vm8 = vcmask 523264
    %9 = vst.msk [vmem:[#allocation2] sm:$0x1] %vm8, %v7
    %v10 = vld [vmem:[#allocation3] sm:$0x1]
    %11 = vrot.lane.b32.xlu0 %v10, 64
    %v12 = vpop.permute.xlu0 %11
    %vm13 = vcmask 523264
    %s14 = scalar_lea.vmem [#allocation2], 1
    %15 = vst.msk [vmem:[%s14] sm:$0x1] %vm13, %v12
    %s17 = sshllo.u32 0, 2
    %v19 = vld [vmem:[#allocation2] sm:%s17]
    %s20 = sshllo.u32 0, 2
    %21 = vst [vmem:[#allocation0] sm:%s20] %v19
    %s23 = ssub.s32 32, 32
    %24 = vsyncadd [#allocation1], %s23
    %s26 = sshll.u32 [#allocation0], 4
    %s27 = int_to_ptr.vmem [resolvable:$true] %s26
    %29 = dma.vmem_to_hbm [thread:$0]  %s27, 32, %s1, [#allocation1]
    %30 = dma.done [#allocation1], 32
    %31 = vsyncpa [#allocation1], 1

// kernel: rsc_nn_forward.1
$region0: #{rsc_nn_forward.1}
  #allocation0 [shape = 'u32[]', space=smem, size = 0x4, offset = 0x4, fixed_abs, tag = 'smem constant byte address 0x4 - core index']
  #allocation1 [shape = 'u32[144,128]{1,0:T(1,128)}', space=vmem, size = 0x12000, scoped, tag = 'internal scratch']
  %s0 = inlined_call_operand.vmem [shape: f32[8,16], index: 0, kind: input, shape index: {}]
  %s1 = inlined_call_operand.vmem [shape: bf16[16,32], index: 1, kind: input, shape index: {}]
  %s2 = inlined_call_operand.vmem [shape: f32[1,32], index: 2, kind: input, shape index: {}]
  %s3 = inlined_call_operand.hbm [shape: bf16[32,256], index: 3, kind: input, shape index: {}]
  %s4 = inlined_call_operand.vmem [shape: f32[1,256], index: 4, kind: input, shape index: {}]
  %s5 = inlined_call_operand.vmem [shape: f32[8,256], index: 5, kind: output, shape index: {}]
  %s6 = sld [smem:[#allocation0]]
  $region34: #{rsc_nn_forward.1} parent=0
    _
  %s8 = ssub.s32 1, %s6
  %s9 = scalar_select 0, %s8, %s6
  $region1: #{rsc_nn_forward.1} parent=0
    #allocation2 [shape = 'u8[16384]{0}', space=vmem, size = 0x4000, scoped, tag = 'input window, operand 3, single buffered']
    #allocation3 [shape = 's32[1]{0}', space=sflag, size = 0x4, scoped, tag = 'scoped memory for rsc_nn_forward.1']
    %10 = vsyncpa [#allocation3], 0
    // Predicated region
    $region2: #{rsc_nn_forward.1} parent=1 // pred_check
      _
    $region3: #{rsc_nn_forward.1} parent=1 // pred_check_branch
      %12 = sbr.rel (0) target = $region5
    $region4: #{rsc_nn_forward.1} parent=1 // pred_region
      _
    $region5: #{rsc_nn_forward.1} parent=1 // pred_fallthru
      _
    // Predicated region
    $region6: #{rsc_nn_forward.1} parent=1 // pred_check
      _
    $region7: #{rsc_nn_forward.1} parent=1 // pred_check_branch
      %14 = sbr.rel (0) target = $region9
    $region8: #{rsc_nn_forward.1} parent=1 // pred_region
      _
    $region9: #{rsc_nn_forward.1} parent=1 // pred_fallthru
      _
    // Predicated region
    $region10: #{rsc_nn_forward.1} parent=1 // pred_check
      _
    $region11: #{rsc_nn_forward.1} parent=1 // pred_check_branch
      %16 = sbr.rel (0) target = $region13
    $region12: #{rsc_nn_forward.1} parent=1 // pred_region
      _
    $region13: #{rsc_nn_forward.1} parent=1 // pred_fallthru
      _
    // Predicated region
    $region14: #{rsc_nn_forward.1} parent=1 // pred_check
      _
    $region15: #{rsc_nn_forward.1} parent=1 // pred_check_branch
      %18 = sbr.rel (0) target = $region17
    $region16: #{rsc_nn_forward.1} parent=1 // pred_region
      %s20 = ssub.s32 512, 512
      %21 = vsyncadd [#allocation3], %s20
      %s22 = sshll.u32 [#allocation2], 4
      %s23 = int_to_ptr.vmem [resolvable:$true] %s22
      %28 = dma.hbm_to_vmem [thread:$0]  %s3, 512, %s23, [#allocation3], 128, 128, 8
    $region17: #{rsc_nn_forward.1} parent=1 // pred_fallthru
      _
    // Predicated region
    $region18: #{rsc_nn_forward.1} parent=1 // pred_check
      _
    $region19: #{rsc_nn_forward.1} parent=1 // pred_check_branch
      %30 = sbr.rel (0) target = $region21
    $region20: #{rsc_nn_forward.1} parent=1 // pred_region
      _
    $region21: #{rsc_nn_forward.1} parent=1 // pred_fallthru
      _
    // Predicated region
    $region22: #{rsc_nn_forward.1} parent=1 // pred_check
      _
    $region23: #{rsc_nn_forward.1} parent=1 // pred_check_branch
      %32 = sbr.rel (0) target = $region25
    $region24: #{rsc_nn_forward.1} parent=1 // pred_region
      %33 = dma.done [#allocation3], 512
    $region25: #{rsc_nn_forward.1} parent=1 // pred_fallthru
      _
    %v35 = vld [vmem:[%s0] sm:$0xff]
    %v36 = vpack.c.bf16 %v35, %v35
    %v37 = vld [vmem:[%s1] sm:$0xf]
    %v38 = vld [vmem:[%s1 + $0x4] sm:$0xf]
    %v39 = vld [vmem:[%s2] sm:$0x1]
    %v41 = vlaneseq
    %v42 = vshrl.u32 %v41, 7
    %v43 = vsub.s32 0, %v42
    %v44 = vrot.slane %v39, %v43
    %v48 = vunpack.c.l.b16 %v37
    %v49 = vunpack.c.l.b16 %v38
    %v50 = vpack.c.b16 %v49, %v48
    %vm52 = vcmask 130048
    %v54 = vsel %vm52, %v36, 0
    %56 = vmatprep.subr.bf16.mxu0 0
    %57 = vmatpush1.bf16.msra.mxu0 %v50
    %58 = vmatprep.subr.bf16.mxu0 0
    %59 = vmatpush1.bf16.msra.mxu0 0
    %60 = vmatprep.subr.bf16.mxu0 0
    %61 = vmatpush1.bf16.msra.mxu0 0
    %62 = vmatprep.subr.bf16.mxu0 0
    %63 = vmatpush1.bf16.msra.mxu0 0
    %64 = vmatprep.subr.bf16.mxu0 0
    %65 = vmatpush1.bf16.msra.mxu0 0
    %66 = vmatprep.subr.bf16.mxu0 0
    %67 = vmatpush1.bf16.msra.mxu0 0
    %68 = vmatprep.subr.bf16.mxu0 0
    %69 = vmatpush1.bf16.msra.mxu0 0
    %70 = vmatprep.subr.bf16.mxu0 0
    %71 = vmatpush1.bf16.msra.mxu0 0
    %72 = vmatprep.subr.bf16.mxu0 0
    %73 = vmatpush1.bf16.msra.mxu0 0
    %74 = vmatprep.subr.bf16.mxu0 0
    %75 = vmatpush1.bf16.msra.mxu0 0
    %76 = vmatprep.subr.bf16.mxu0 0
    %77 = vmatpush1.bf16.msra.mxu0 0
    %78 = vmatprep.subr.bf16.mxu0 0
    %79 = vmatpush1.bf16.msra.mxu0 0
    %80 = vmatprep.subr.bf16.mxu0 0
    %81 = vmatpush1.bf16.msra.mxu0 0
    %82 = vmatprep.subr.bf16.mxu0 0
    %83 = vmatpush1.bf16.msra.mxu0 0
    %84 = vmatprep.subr.bf16.mxu0 0
    %85 = vmatpush1.bf16.msra.mxu0 0
    %86 = vmatprep.subr.bf16.mxu0 0
    %87 = vmatpush1.bf16.msra.mxu0 0
    %88 = vmatprep.mubr.bf16.mxu0 0
    %89 = vmatmul.mubr.bf16.gmra.mrb[0].mxu0 %v54
    %v90 = vpop.f32.mrb[0].mxu0
    %v91 = vadd.f32 %v44, %v90
    %v92 = vpop.f32.mrb[0].mxu0
    %v93 = vpop.f32.mrb[0].mxu0
    %v94 = vpop.f32.mrb[0].mxu0
    %95 = vdwg.mxu0
    %v96 = vmax.f32 %v91, 0.0
    %v97 = vpack.c.bf16 %v96, %v96
    %v98 = vld [vmem:[#allocation2] sm:$0xff]
    %v99 = vld [vmem:[#allocation2 + $0x8] sm:$0xff]
    %v100 = vld [vmem:[#allocation2 + $0x10] sm:$0xff]
    %v101 = vld [vmem:[#allocation2 + $0x18] sm:$0xff]
    %v102 = vld [vmem:[%s4] sm:$0x3]
    %v104 = vlaneseq
    %v105 = vshrl.u32 %v104, 7
    %v106 = vsub.s32 0, %v105
    %v107 = vrot.slane %v102, %v106
    %v108 = vlaneseq
    %v109 = vshrl.u32 %v108, 7
    %v110 = vsub.s32 1, %v109
    %v111 = vrot.slane %v102, %v110
    %v118 = vunpack.c.l.b16 %v98
    %v119 = vunpack.c.h.b16 %v98
    %v120 = vunpack.c.l.b16 %v99
    %v121 = vunpack.c.h.b16 %v99
    %v122 = vunpack.c.l.b16 %v100
    %v123 = vunpack.c.h.b16 %v100
    %v124 = vunpack.c.l.b16 %v101
    %v125 = vunpack.c.h.b16 %v101
    %v126 = vpack.c.b16 %v120, %v118
    %v127 = vpack.c.b16 %v121, %v119
    %v128 = vpack.c.b16 %v124, %v122
    %v129 = vpack.c.b16 %v125, %v123
    %vm134 = vcmask 261120
    %v136 = vsel %vm134, %v97, 0
    %138 = vmatprep.subr.bf16.mxu0 %v127
    %139 = vmatpush1.bf16.msra.mxu0 %v126
    %140 = vmatprep.subr.bf16.mxu0 %v129
    %141 = vmatpush1.bf16.msra.mxu0 %v128
    %142 = vmatprep.subr.bf16.mxu0 0
    %143 = vmatpush1.bf16.msra.mxu0 0
    %144 = vmatprep.subr.bf16.mxu0 0
    %145 = vmatpush1.bf16.msra.mxu0 0
    %146 = vmatprep.subr.bf16.mxu0 0
    %147 = vmatpush1.bf16.msra.mxu0 0
    %148 = vmatprep.subr.bf16.mxu0 0
    %149 = vmatpush1.bf16.msra.mxu0 0
    %150 = vmatprep.subr.bf16.mxu0 0
    %151 = vmatpush1.bf16.msra.mxu0 0
    %152 = vmatprep.subr.bf16.mxu0 0
    %153 = vmatpush1.bf16.msra.mxu0 0
    %154 = vmatprep.subr.bf16.mxu0 0
    %155 = vmatpush1.bf16.msra.mxu0 0
    %156 = vmatprep.subr.bf16.mxu0 0
    %157 = vmatpush1.bf16.msra.mxu0 0
    %158 = vmatprep.subr.bf16.mxu0 0
    %159 = vmatpush1.bf16.msra.mxu0 0
    %160 = vmatprep.subr.bf16.mxu0 0
    %161 = vmatpush1.bf16.msra.mxu0 0
    %162 = vmatprep.subr.bf16.mxu0 0
    %163 = vmatpush1.bf16.msra.mxu0 0
    %164 = vmatprep.subr.bf16.mxu0 0
    %165 = vmatpush1.bf16.msra.mxu0 0
    %166 = vmatprep.subr.bf16.mxu0 0
    %167 = vmatpush1.bf16.msra.mxu0 0
    %168 = vmatprep.subr.bf16.mxu0 0
    %169 = vmatpush1.bf16.msra.mxu0 0
    %170 = vmatprep.mubr.bf16.mxu0 0
    %171 = vmatmul.mubr.bf16.gmra.mrb[0].mxu0 %v136
    %v172 = vpop.f32.mrb[0].mxu0
    %v173 = vadd.f32 %v107, %v172
    %v174 = vpop.f32.mrb[0].mxu0
    %v175 = vadd.f32 %v111, %v174
    %v176 = vpop.f32.mrb[0].mxu0
    %v177 = vpop.f32.mrb[0].mxu0
    %178 = vdwg.mxu0
    %v179 = vxor.u32 %v173, 2147483648
    %v180 = vmul.f32 %v179, 1.442695
    %v181 = vpow.pop %v180
    %v182 = vadd.f32 %v181, 1.0
    %v183 = vrcp.pop %v182
    %v184 = vmul.f32 1.0, %v183
    %185 = vst [vmem:[%s5] sm:$0xff] %v184
    %v186 = vtanh.pop %v175
    %187 = vst [vmem:[%s5 + $0x8] sm:$0xff] %v186
    // Predicated region
    $region26: #{rsc_nn_forward.1} parent=1 // pred_check
      _
    $region27: #{rsc_nn_forward.1} parent=1 // pred_check_branch
      %189 = sbr.rel (0) target = $region29
    $region28: #{rsc_nn_forward.1} parent=1 // pred_region
      _
    $region29: #{rsc_nn_forward.1} parent=1 // pred_fallthru
      _
    // Predicated region
    $region30: #{rsc_nn_forward.1} parent=1 // pred_check
      _
    $region31: #{rsc_nn_forward.1} parent=1 // pred_check_branch
      %191 = sbr.rel (0) target = $region33
    $region32: #{rsc_nn_forward.1} parent=1 // pred_region
      _
    $region33: #{rsc_nn_forward.1} parent=1 // pred_fallthru
      _
    %192 = vsyncpa [#allocation3], 1

</llo_original>
